<compile_context>
chip_gen: v5e
topology: v5e:2x2
jax: 0.10.0
libtpu: 0.0.40
codegen_flags: <defaults>
</compile_context>

<pallas_src>
import functools

import jax
import jax.numpy as jnp
from jax.experimental import pallas as pl
from jax.experimental.pallas import tpu as pltpu


def _layernorm_kernel(x_ref, gamma_ref, beta_ref, o_ref, *, eps):
    # One upcast of the tile to f32 (no-op for f32 inputs); reductions stay in f32.
    x = x_ref[...].astype(jnp.float32)                       # (tile_rows, D)
    d = x.shape[-1]

    # Fused single pass over the lane axis: sum(x) and sum(x*x) together,
    # instead of two dependent reduction passes over (x - mean).
    s1 = jnp.sum(x, axis=-1, keepdims=True)                  # (tile_rows, 1)
    s2 = jnp.sum(x * x, axis=-1, keepdims=True)              # (tile_rows, 1)
    inv_d = 1.0 / d
    mean = s1 * inv_d

    # torch.std semantics: unbiased estimator (divide by N-1); eps added to std,
    # NOT inside the sqrt.  Clamp to >=0 to guard against cancellation rounding.
    var = jnp.maximum(s2 - mean * s1, 0.0) * (1.0 / max(d - 1, 1))
    std = jnp.sqrt(var)

    # Per-row reciprocal on the EUP (otherwise idle here); per-element work is a multiply.
    inv = pl.reciprocal(std + eps, approx=True)              # (tile_rows, 1)

    ln = (x - mean) * inv
    out = gamma_ref[...].astype(jnp.float32) * ln + beta_ref[...].astype(jnp.float32)
    o_ref[...] = out.astype(o_ref.dtype)


def _round_up(a, b):
    return ((a + b - 1) // b) * b


def layer_norm(x, gamma, beta, eps=1e-6, tile_rows=512,
               vmem_limit_bytes=64 * 1024 * 1024):
    """x: (..., d_hid); gamma, beta: (d_hid,).

    LayerNorm is HBM-bandwidth bound, so rows are tiled into large blocks
    (hundreds of rows) rather than 8-row blocks.  The tile is sized so that
    double-buffered input + output plus f32 temporaries stay well inside the
    64 MiB physical VMEM of v7x (also fine on v5e/v6e), and the row count is
    kept a multiple of the sublane packing (8 for 32-bit, 16 for 16-bit dtypes).
    Ragged row counts are handled by padding to a tile multiple (no hard assert).
    For best store-path utilization, d_hid should be a multiple of 128
    (lane-dense output); other sizes still work but use masked partial stores.
    """
    orig_shape = x.shape
    d = orig_shape[-1]
    x2 = x.reshape(-1, d)
    n = x2.shape[0]

    itemsize = jnp.dtype(x.dtype).itemsize
    sub = 8 if itemsize >= 4 else 16          # sublane granularity per dtype

    # VMEM usage per block-row ~ 2x double-buffered input + 2x double-buffered
    # output + ~4 f32 temporaries.  Keep total under a conservative budget so
    # the same tiling fits v7x (64 MiB VMEM) as well as v5e/v6e.
    usage_budget = 40 * 1024 * 1024
    bytes_per_row = d * (2 * itemsize + 2 * itemsize + 4 * 4)
    max_tr = max(sub, (usage_budget // max(bytes_per_row, 1)) // sub * sub)

    tr = min(tile_rows, max_tr, _round_up(n, sub))
    tr = max(sub, (tr // sub) * sub)

    n_pad = _round_up(n, tr)
    if n_pad != n:
        x2 = jnp.pad(x2, ((0, n_pad - n), (0, 0)))

    gamma2 = gamma.reshape(1, d)
    beta2 = beta.reshape(1, d)

    out = pl.pallas_call(
        functools.partial(_layernorm_kernel, eps=eps),
        out_shape=jax.ShapeDtypeStruct((n_pad, d), x.dtype),
        grid_spec=pltpu.PrefetchScalarGridSpec(
            num_scalar_prefetch=0,
            grid=(n_pad // tr,),
            in_specs=[
                pl.BlockSpec((tr, d), lambda i: (i, 0)),
                pl.BlockSpec((1, d), lambda i: (0, 0)),   # gamma stays resident
                pl.BlockSpec((1, d), lambda i: (0, 0)),   # beta stays resident
            ],
            out_specs=pl.BlockSpec((tr, d), lambda i: (i, 0)),
        ),
        compiler_params=pltpu.CompilerParams(
            dimension_semantics=("parallel",),   # rows shard across TCs (v7x megacore)
            vmem_limit_bytes=vmem_limit_bytes,
        ),
    )(x2, gamma2, beta2)

    if n_pad != n:
        out = out[:n]
    return out.reshape(orig_shape)


if __name__ == "__main__":
    key = jax.random.PRNGKey(0)
    # Small demo shapes; d_hid=128 keeps the feature axis lane-dense (multiple of 128).
    batch, seq, d_hid = 2, 8, 128

    x = jax.random.normal(key, (batch, seq, d_hid), dtype=jnp.float32)
    # Deterministic parameter init, matching nn.Parameter(torch.ones/zeros).
    gamma = jnp.ones((d_hid,), dtype=jnp.float32)
    beta = jnp.zeros((d_hid,), dtype=jnp.float32)

    out = layer_norm(x, gamma, beta, eps=1e-6)
    jax.block_until_ready(out)

    # Pure-JAX reference (torch semantics: unbiased std, eps added to std).
    mean = jnp.mean(x, axis=-1, keepdims=True)
    std = jnp.sqrt(jnp.sum((x - mean) ** 2, axis=-1, keepdims=True) / (d_hid - 1))
    ref = gamma * ((x - mean) / (std + 1e-6)) + beta
    # Tolerance loosened slightly: pl.reciprocal(approx=True) has ~bf16-level accuracy.
    assert jnp.allclose(out, ref, atol=1e-2, rtol=1e-2), "mismatch vs reference"

    print("KERNEL_OK")
</pallas_src>

<mosaic_0001>
module attributes {stable_mosaic.version = 11 : i64} {
  func.func @_layernorm_kernel(%arg0: i32, %arg1: memref<16x128xf32, #tpu.memory_space<vmem>>, %arg2: memref<1x128xf32, #tpu.memory_space<vmem>>, %arg3: memref<1x128xf32, #tpu.memory_space<vmem>>, %arg4: memref<16x128xf32, #tpu.memory_space<vmem>>) attributes {dimension_semantics = [#tpu.dimension_semantics<parallel>], iteration_bounds = array<i64: 1>, scalar_prefetch = 0 : i64, scratch_operands = 0 : i64, tpu.core_type = #tpu.core_type<tc>, window_params = [{transform_indices = @transform_0, window_bounds = array<i64: 16, 128>}, {pipeline_mode = #tpu.pipeline_mode<synchronous>, transform_indices = @transform_1, window_bounds = array<i64: 1, 128>}, {pipeline_mode = #tpu.pipeline_mode<synchronous>, transform_indices = @transform_2, window_bounds = array<i64: 1, 128>}, {transform_indices = @transform_3, window_bounds = array<i64: 16, 128>}]} {
    %c0 = arith.constant 0 : index
    %c0_0 = arith.constant 0 : index
    %0 = vector.load %arg1[%c0, %c0_0] : memref<16x128xf32, #tpu.memory_space<vmem>>, vector<16x128xf32>
    %cst = arith.constant dense<0.000000e+00> : vector<16xf32>
    %1 = vector.multi_reduction <add>, %0, %cst [1] : vector<16x128xf32> to vector<16xf32>
    %2 = vector.shape_cast %1 : vector<16xf32> to vector<16x1xf32>
    %3 = arith.mulf %0, %0 : vector<16x128xf32>
    %cst_1 = arith.constant dense<0.000000e+00> : vector<16xf32>
    %4 = vector.multi_reduction <add>, %3, %cst_1 [1] : vector<16x128xf32> to vector<16xf32>
    %5 = vector.shape_cast %4 : vector<16xf32> to vector<16x1xf32>
    %cst_2 = arith.constant 7.812500e-03 : f32
    %6 = vector.broadcast %cst_2 : f32 to vector<16x1xf32>
    %7 = arith.mulf %2, %6 : vector<16x1xf32>
    %8 = arith.mulf %7, %2 : vector<16x1xf32>
    %9 = arith.subf %5, %8 : vector<16x1xf32>
    %cst_3 = arith.constant 0.000000e+00 : f32
    %10 = vector.broadcast %cst_3 : f32 to vector<16x1xf32>
    %11 = arith.maximumf %9, %10 : vector<16x1xf32>
    %cst_4 = arith.constant 0.00787401571 : f32
    %12 = vector.broadcast %cst_4 : f32 to vector<16x1xf32>
    %13 = arith.mulf %11, %12 : vector<16x1xf32>
    %14 = math.sqrt %13 : vector<16x1xf32>
    %cst_5 = arith.constant 9.99999997E-7 : f32
    %15 = vector.broadcast %cst_5 : f32 to vector<16x1xf32>
    %16 = arith.addf %14, %15 : vector<16x1xf32>
    %17 = tpu.reciprocal %16 {approx = true} : vector<16x1xf32> -> vector<16x1xf32>
    %18 = vector.broadcast %7 : vector<16x1xf32> to vector<16x128xf32>
    %19 = arith.subf %0, %18 : vector<16x128xf32>
    %20 = vector.broadcast %17 : vector<16x1xf32> to vector<16x128xf32>
    %21 = arith.mulf %19, %20 : vector<16x128xf32>
    %c0_6 = arith.constant 0 : index
    %c0_7 = arith.constant 0 : index
    %22 = vector.load %arg2[%c0_6, %c0_7] : memref<1x128xf32, #tpu.memory_space<vmem>>, vector<1x128xf32>
    %23 = vector.broadcast %22 : vector<1x128xf32> to vector<16x128xf32>
    %24 = arith.mulf %23, %21 : vector<16x128xf32>
    %c0_8 = arith.constant 0 : index
    %c0_9 = arith.constant 0 : index
    %25 = vector.load %arg3[%c0_8, %c0_9] : memref<1x128xf32, #tpu.memory_space<vmem>>, vector<1x128xf32>
    %26 = vector.broadcast %25 : vector<1x128xf32> to vector<16x128xf32>
    %27 = arith.addf %24, %26 : vector<16x128xf32>
    %c0_10 = arith.constant 0 : index
    %c0_11 = arith.constant 0 : index
    %28 = vector.load %arg4[%c0_10, %c0_11] : memref<16x128xf32, #tpu.memory_space<vmem>>, vector<16x128xf32>
    tpu.vector_store %arg4[%c0_10, %c0_11], %27 {strides = array<i32>} : memref<16x128xf32, #tpu.memory_space<vmem>>, vector<16x128xf32>,
    return
  }
  func.func @transform_0(%arg0: i32) -> (i32, i32) {
    %c0_i32 = arith.constant 0 : i32
    %c0_i32_0 = arith.constant 0 : i32
    return %arg0, %c0_i32 : i32, i32
  }
  func.func @transform_1(%arg0: i32) -> (i32, i32) {
    %c0_i32 = arith.constant 0 : i32
    %c0_i32_0 = arith.constant 0 : i32
    %c0_i32_1 = arith.constant 0 : i32
    return %c0_i32, %c0_i32_0 : i32, i32
  }
  func.func @transform_2(%arg0: i32) -> (i32, i32) {
    %c0_i32 = arith.constant 0 : i32
    %c0_i32_0 = arith.constant 0 : i32
    %c0_i32_1 = arith.constant 0 : i32
    return %c0_i32, %c0_i32_0 : i32, i32
  }
  func.func @transform_3(%arg0: i32) -> (i32, i32) {
    %c0_i32 = arith.constant 0 : i32
    %c0_i32_0 = arith.constant 0 : i32
    return %arg0, %c0_i32 : i32, i32
  }
}

</mosaic_0001>

<llo_original>
// kernel: tpu_custom_call.1
$region0: #{tpu_custom_call.1}
  #allocation0 [shape = 'u32[]', space=smem, size = 0x4, offset = 0x4, fixed_abs, tag = 'smem constant byte address 0x4 - core index']
  #allocation1 [shape = 'u32[72,128]{1,0:T(1,128)}', space=vmem, size = 0x9000, scoped, tag = 'internal scratch']
  %s0 = inlined_call_operand.hbm [shape: f32[16,128], index: 0, kind: input, shape index: {}]
  %s1 = inlined_call_operand.hbm [shape: f32[1,128], index: 1, kind: input, shape index: {}]
  %s2 = inlined_call_operand.vmem [shape: f32[1,128], index: 2, kind: input, shape index: {}]
  %s3 = inlined_call_operand.hbm [shape: f32[16,128], index: 3, kind: output, shape index: {}]
  %s4 = sld [smem:[#allocation0]]
  $region30: #{tpu_custom_call.1} parent=0
    _
  %s6 = ssub.s32 1, %s4
  %s7 = scalar_select 0, %s6, %s4
  $region1: #{tpu_custom_call.1} parent=0
    #allocation2 [shape = 'u8[8192]{0}', space=vmem, size = 0x2000, scoped, tag = 'input window, operand 0, single buffered']
    #allocation3 [shape = 's32[1]{0}', space=sflag, size = 0x4, scoped, tag = 'scoped memory for tpu_custom_call.1']
    #allocation4 [shape = 's32[1]{0}', space=sflag, size = 0x4, scoped, tag = 'scoped memory for tpu_custom_call.1']
    #allocation5 [shape = 'u8[512]{0}', space=vmem, size = 0x400, scoped, tag = 'input window, operand 1, single buffered']
    #allocation6 [shape = 's32[1]{0}', space=sflag, size = 0x4, scoped, tag = 'scoped memory for tpu_custom_call.1']
    #allocation7 [shape = 'u8[8192]{0}', space=vmem, size = 0x2000, scoped, tag = 'output window, operand 0, single buffered']
    %8 = vsyncpa [#allocation3], 0
    %9 = vsyncpa [#allocation6], 0
    %10 = vsyncpa [#allocation4], 0
    // Predicated region
    $region2: #{tpu_custom_call.1} parent=1 // pred_check
      _
    $region3: #{tpu_custom_call.1} parent=1 // pred_check_branch
      %12 = sbr.rel (0) target = $region5
    $region4: #{tpu_custom_call.1} parent=1 // pred_region
      %14 = vsyncadd [#allocation3], 0
      %s15 = sshll.u32 %s0, 4
      %s16 = int_to_ptr.hbm [resolvable:$true] %s15
      %s17 = sshll.u32 [#allocation2], 4
      %s18 = int_to_ptr.vmem [resolvable:$true] %s17
      %23 = dma.hbm_to_vmem [thread:$0]  %s16, 256, %s18, [#allocation3], 128, 128, 8
    $region5: #{tpu_custom_call.1} parent=1 // pred_fallthru
      _
    // Predicated region
    $region6: #{tpu_custom_call.1} parent=1 // pred_check
      _
    $region7: #{tpu_custom_call.1} parent=1 // pred_check_branch
      %25 = sbr.rel (0) target = $region9
    $region8: #{tpu_custom_call.1} parent=1 // pred_region
      %27 = vsyncadd [#allocation6], 0
      %s29 = sshll.u32 %s1, 4
      %s30 = int_to_ptr.hbm [resolvable:$true] %s29
      %s31 = sshll.u32 [#allocation5], 4
      %s32 = int_to_ptr.vmem [resolvable:$true] %s31
      %34 = dma.hbm_to_vmem [thread:$0]  %s30, 16, %s32, [#allocation6]
    $region9: #{tpu_custom_call.1} parent=1 // pred_fallthru
      _
    // Predicated region
    $region10: #{tpu_custom_call.1} parent=1 // pred_check
      _
    $region11: #{tpu_custom_call.1} parent=1 // pred_check_branch
      %36 = sbr.rel (0) target = $region13
    $region12: #{tpu_custom_call.1} parent=1 // pred_region
      _
    $region13: #{tpu_custom_call.1} parent=1 // pred_fallthru
      _
    // Predicated region
    $region14: #{tpu_custom_call.1} parent=1 // pred_check
      _
    $region15: #{tpu_custom_call.1} parent=1 // pred_check_branch
      %38 = sbr.rel (0) target = $region17
    $region16: #{tpu_custom_call.1} parent=1 // pred_region
      %40 = dma.done [#allocation3], 256
    $region17: #{tpu_custom_call.1} parent=1 // pred_fallthru
      _
    // Predicated region
    $region18: #{tpu_custom_call.1} parent=1 // pred_check
      _
    $region19: #{tpu_custom_call.1} parent=1 // pred_check_branch
      %42 = sbr.rel (0) target = $region21
    $region20: #{tpu_custom_call.1} parent=1 // pred_region
      %44 = dma.done [#allocation6], 16
    $region21: #{tpu_custom_call.1} parent=1 // pred_fallthru
      _
    %v45 = vld [vmem:[#allocation2] sm:$0xff]
    %v46 = vld [vmem:[#allocation2 + $0x8] sm:$0xff]
    %47 = vadd.xlane.f32.xlu0 %v45
    %v48 = vpop.xlane.xlu0 %47
    %49 = vadd.xlane.f32.xlu0 %v46
    %v50 = vpop.xlane.xlu0 %49
    %v51 = vmul.f32 %v45, %v45
    %v52 = vmul.f32 %v46, %v46
    %53 = vadd.xlane.f32.xlu0 %v51
    %v54 = vpop.xlane.xlu0 %53
    %55 = vadd.xlane.f32.xlu0 %v52
    %v56 = vpop.xlane.xlu0 %55
    %v57 = vmul.f32 %v48, 0.0078125
    %v58 = vmul.f32 %v50, 0.0078125
    %v59 = vmul.f32 %v57, %v48
    %v60 = vmul.f32 %v58, %v50
    %v61 = vsub.f32 %v54, %v59
    %v62 = vsub.f32 %v56, %v60
    %v63 = vmax.f32 %v61, 0.0
    %v64 = vmax.f32 %v62, 0.0
    %v65 = vmul.f32 %v63, 0.007874016
    %v66 = vmul.f32 %v64, 0.007874016
    %v67 = vrsqrt.pop %v65
    %v68 = vmul.f32 %v67, %v65
    %v69 = vmul.f32 %v68, %v67
    %v70 = vmul.f32 0.5, %v69
    %v71 = vsub.f32 1.5, %v70
    %v72 = vmul.f32 %v67, %v71
    %v73 = vmul.f32 %v65, %v72
    %vm74 = vcmp.eq.f32.partialorder %v65, inf
    %v75 = vsel %vm74, %v65, %v73
    %vm76 = vcmp.eq.f32.partialorder %v65, 0.0
    %v77 = vand.u32 %v65, 2147483648
    %v78 = vsel %vm76, %v77, %v75
    %v79 = vrsqrt.pop %v66
    %v80 = vmul.f32 %v79, %v66
    %v81 = vmul.f32 %v80, %v79
    %v82 = vmul.f32 0.5, %v81
    %v83 = vsub.f32 1.5, %v82
    %v84 = vmul.f32 %v79, %v83
    %v85 = vmul.f32 %v66, %v84
    %vm86 = vcmp.eq.f32.partialorder %v66, inf
    %v87 = vsel %vm86, %v66, %v85
    %vm88 = vcmp.eq.f32.partialorder %v66, 0.0
    %v89 = vand.u32 %v66, 2147483648
    %v90 = vsel %vm88, %v89, %v87
    %v91 = vadd.f32 %v78, 1e-06
    %v92 = vadd.f32 %v90, 1e-06
    %v93 = vrcp.pop %v91
    %v94 = vrcp.pop %v92
    %v95 = vsub.f32 %v45, %v57
    %v96 = vsub.f32 %v46, %v58
    %v97 = vmul.f32 %v95, %v93
    %v98 = vmul.f32 %v96, %v94
    %v99 = vld [vmem:[#allocation5] sm:$0x1]
    %v101 = vperm.slane %v99, 0
    %v103 = vmul.f32 %v101, %v97
    %v104 = vmul.f32 %v101, %v98
    %v105 = vld [vmem:[%s2] sm:$0x1]
    %v107 = vperm.slane %v105, 0
    %v109 = vadd.f32 %v103, %v107
    %v110 = vadd.f32 %v104, %v107
    %111 = vst [vmem:[#allocation7] sm:$0xff] %v109
    %112 = vst [vmem:[#allocation7 + $0x8] sm:$0xff] %v110
    // Predicated region
    $region22: #{tpu_custom_call.1} parent=1 // pred_check
      _
    $region23: #{tpu_custom_call.1} parent=1 // pred_check_branch
      %114 = sbr.rel (0) target = $region25
    $region24: #{tpu_custom_call.1} parent=1 // pred_region
      %116 = vsyncadd [#allocation4], 0
      %s117 = sshll.u32 [#allocation7], 4
      %s118 = int_to_ptr.vmem [resolvable:$true] %s117
      %s119 = sshll.u32 %s3, 4
      %s120 = int_to_ptr.hbm [resolvable:$true] %s119
      %125 = dma.vmem_to_hbm [thread:$0]  %s118, 256, %s120, [#allocation4], 128, 128, 8
    $region25: #{tpu_custom_call.1} parent=1 // pred_fallthru
      _
    // Predicated region
    $region26: #{tpu_custom_call.1} parent=1 // pred_check
      _
    $region27: #{tpu_custom_call.1} parent=1 // pred_check_branch
      %127 = sbr.rel (0) target = $region29
    $region28: #{tpu_custom_call.1} parent=1 // pred_region
      %129 = dma.done [#allocation4], 256
    $region29: #{tpu_custom_call.1} parent=1 // pred_fallthru
      _
    %130 = vsyncpa [#allocation3], 1
    %131 = vsyncpa [#allocation6], 1
    %132 = vsyncpa [#allocation4], 1

</llo_original>
